<compile_context>
chip_gen: v5e
topology: v5e:2x2
jax: 0.10.0
libtpu: 0.0.40
codegen_flags: <defaults>
</compile_context>

<pallas_src>
import math
import functools

import jax
import jax.numpy as jnp
from jax import lax
from jax.experimental import pallas as pl
from jax.experimental.pallas import tpu as pltpu


def _pool_geometry(h, w, b):
    """Replicates the PyTorch kernel/stride/output-size arithmetic."""
    kh, kw = math.ceil(h / b), math.ceil(w / b)
    sh, sw = math.floor(h / b), math.floor(w / b)
    oh = (h - kh) // sh + 1   # F.max_pool2d / avg_pool2d, no padding, ceil_mode=False
    ow = (w - kw) // sw + 1
    return kh, kw, sh, sw, oh, ow


def _spp_kernel(x_ref, o_ref, *, levels, mode):
    """One batch element per grid step.

    x_ref: (1, H, W, C) channels-last block in VMEM.
    o_ref: (1, W_total, C) lane-dense output, W_total = sum_b oh_b*ow_b.
           Row index inside each level's segment is i*ow + j (i over oh, j over ow).
    """
    x = x_ref[0]                                   # (H, W, C)
    H, W, C = x.shape
    if mode == "avg":
        x = x.astype(jnp.float32)                  # f32 accumulation for mean only
    reduce = jnp.max if mode == "max" else jnp.sum

    off = 0
    for (kh, kw, sh, sw, oh, ow) in levels:
        # --- pool along H:  (H, W, C) -> (oh, W, C)
        if kh == sh:
            # Non-overlapping along H: single vectorized reshape + reduce.
            t = reduce(x.reshape(oh, kh, W, C), axis=1)
        else:
            # Overlapping / ragged along H: oh static slabs, each reduced on VPU.
            t = jnp.concatenate(
                [reduce(x[i * sh:i * sh + kh, :, :], axis=0, keepdims=True)
                 for i in range(oh)],
                axis=0)

        # --- pool along W:  (oh, W, C) -> (oh, ow, C)
        if kw == sw:
            t = reduce(t.reshape(oh, ow, kw, C), axis=2)
        else:
            t = jnp.concatenate(
                [reduce(t[:, j * sw:j * sw + kw, :], axis=1, keepdims=True)
                 for j in range(ow)],
                axis=1)

        chunk = t.reshape(oh * ow, C)
        if mode == "avg":
            chunk = chunk * (1.0 / (kh * kw))

        o_ref[0, off:off + oh * ow, :] = chunk.astype(o_ref.dtype)
        off += oh * ow


def spatial_pyramid_pool2d(x, bins, mode="max"):
    """Pallas implementation of nintorch's spatial_pyramid_pool2d.

    Args:
      x:    (B, C, H, W) array (NCHW, like PyTorch).
      bins: int or list[int] pyramid levels.
      mode: 'max' | 'avg' | 'average' | 'mean'.
    Returns:
      (B, sum_b C*out_h_b*out_w_b) array, same dtype as x, PyTorch flatten order.
    """
    mode = mode.lower()
    if mode not in ("max", "avg", "average", "mean"):
        raise NotImplementedError(
            f"`mode` only accepts `max`, `avg`, `average` and `mean`. Your `mode`: {mode}"
        )
    mode = "max" if mode == "max" else "avg"
    bins = [bins] if isinstance(bins, int) else list(bins)

    B, C, H, W = x.shape
    levels = []
    for b in bins:
        if b > H or b > W:
            raise ValueError(f"bin size {b} exceeds spatial dims ({H}, {W})")
        levels.append(_pool_geometry(H, W, b))
    w_total = sum(oh * ow for (_, _, _, _, oh, ow) in levels)

    # Channels-last so C lands on the 128-lane axis inside the kernel.
    x_nhwc = jnp.transpose(x, (0, 2, 3, 1))        # (B, H, W, C)

    kernel = functools.partial(_spp_kernel, levels=tuple(levels), mode=mode)

    itemsize = jnp.dtype(x.dtype).itemsize
    block_bytes = (H * W * C + w_total * C) * max(itemsize, 4)
    # Double-buffered in/out blocks + headroom; safe on v5e (16 MiB default scoped
    # limit) and within v7x's 64 MiB physical VMEM.
    vmem_limit = int(min(48 * 2**20, max(32 * 2**20, 6 * block_bytes)))

    pooled = pl.pallas_call(
        kernel,
        out_shape=jax.ShapeDtypeStruct((B, w_total, C), x.dtype),
        grid=(B,),
        in_specs=[pl.BlockSpec((1, H, W, C), lambda i: (i, 0, 0, 0))],
        out_specs=pl.BlockSpec((1, w_total, C), lambda i: (i, 0, 0)),
        compiler_params=pltpu.CompilerParams(
            dimension_semantics=("parallel",),
            vmem_limit_bytes=vmem_limit,
        ),
    )(x_nhwc)                                      # (B, w_total, C)

    # Wrapper-side layout plumbing: per level, (B, oh*ow, C) -> (B, C, oh, ow) ->
    # flatten, matching PyTorch's flatten(start_dim=1) order (C major, then i, j).
    outs = []
    off = 0
    for (_, _, _, _, oh, ow) in levels:
        seg = pooled[:, off:off + oh * ow, :]
        seg = seg.reshape(B, oh, ow, C).transpose(0, 3, 1, 2).reshape(B, C * oh * ow)
        outs.append(seg)
        off += oh * ow
    return jnp.concatenate(outs, axis=-1)


def _reference_spp(x, bins, mode="max"):
    """Independent pure-JAX reference using lax.reduce_window (NCHW)."""
    mode = mode.lower()
    bins = [bins] if isinstance(bins, int) else list(bins)
    B, C, H, W = x.shape
    xf = x.astype(jnp.float32)
    outs = []
    for b in bins:
        kh, kw, sh, sw, _, _ = _pool_geometry(H, W, b)
        window = (1, 1, kh, kw)
        strides = (1, 1, sh, sw)
        if mode == "max":
            pooled = lax.reduce_window(xf, -jnp.inf, lax.max, window, strides, "VALID")
        else:
            pooled = lax.reduce_window(xf, 0.0, lax.add, window, strides, "VALID") / (kh * kw)
        outs.append(pooled.reshape(B, -1))
    return jnp.concatenate(outs, axis=-1).astype(x.dtype)


class SpatialPyramidPool2d:
    """No learnable parameters — mirrors the nn.Module interface."""

    def __init__(self, bins, mode="max"):
        self.bins = bins
        self.mode = mode

    def __call__(self, x):
        return spatial_pyramid_pool2d(x, bins=self.bins, mode=self.mode)


if __name__ == "__main__":
    key = jax.random.PRNGKey(0)
    # Small NCHW input consistent with the module's expectations.
    x = jax.random.normal(key, (2, 4, 16, 16), dtype=jnp.float32)

    # bins 1,2,4 exercise the vectorized non-overlapping path; bin 3 exercises
    # the overlapping-window (separable slab) path (kh=6, stride=5 on 16).
    bins = [1, 2, 3, 4]
    expected_features = 4 * (1 * 1 + 2 * 2 + 3 * 3 + 4 * 4)   # = 120

    for mode in ("max", "avg"):
        module = SpatialPyramidPool2d(bins=bins, mode=mode)
        out = module(x)
        out = jax.block_until_ready(out)
        ref = _reference_spp(x, bins, mode=mode)
        assert out.shape == (2, expected_features), out.shape
        assert jnp.allclose(out, ref, atol=1e-5, rtol=1e-5), f"mismatch for mode={mode}"

    print("KERNEL_OK")
</pallas_src>

<mosaic_0001>
module attributes {stable_mosaic.version = 11 : i64} {
  func.func @_spp_kernel(%arg0: i32, %arg1: memref<1x16x16x4xf32, #tpu.memory_space<vmem>>, %arg2: memref<1x30x4xf32, #tpu.memory_space<vmem>>) attributes {dimension_semantics = [#tpu.dimension_semantics<parallel>], iteration_bounds = array<i64: 2>, scalar_prefetch = 0 : i64, scratch_operands = 0 : i64, tpu.core_type = #tpu.core_type<tc>, window_params = [{transform_indices = @transform_0, window_bounds = array<i64: 1, 16, 16, 4>}, {transform_indices = @transform_1, window_bounds = array<i64: 1, 30, 4>}]} {
    %c0 = arith.constant 0 : index
    %c0_0 = arith.constant 0 : index
    %c0_1 = arith.constant 0 : index
    %c0_2 = arith.constant 0 : index
    %0 = vector.load %arg1[%c0, %c0_0, %c0_1, %c0_2] : memref<1x16x16x4xf32, #tpu.memory_space<vmem>>, vector<1x16x16x4xf32>
    %1 = vector.shape_cast %0 : vector<1x16x16x4xf32> to vector<16x16x4xf32>
    %2 = vector.shape_cast %1 : vector<16x16x4xf32> to vector<1x16x16x4xf32>
    %cst = arith.constant dense<0xFF800000> : vector<1x16x4xf32>
    %3 = vector.multi_reduction <maximumf>, %2, %cst [1] : vector<1x16x16x4xf32> to vector<1x16x4xf32>
    %4 = vector.shape_cast %3 : vector<1x16x4xf32> to vector<1x1x16x4xf32>
    %cst_3 = arith.constant dense<0xFF800000> : vector<1x1x4xf32>
    %5 = vector.multi_reduction <maximumf>, %4, %cst_3 [2] : vector<1x1x16x4xf32> to vector<1x1x4xf32>
    %6 = vector.shape_cast %5 : vector<1x1x4xf32> to vector<1x4xf32>
    %c0_4 = arith.constant 0 : index
    %c0_5 = arith.constant 0 : index
    %c0_6 = arith.constant 0 : index
    %7 = vector.load %arg2[%c0_4, %c0_5, %c0_6] : memref<1x30x4xf32, #tpu.memory_space<vmem>>, vector<1x1x4xf32>
    %8 = vector.shape_cast %7 : vector<1x1x4xf32> to vector<1x4xf32>
    %9 = vector.shape_cast %6 : vector<1x4xf32> to vector<1x1x4xf32>
    tpu.vector_store %arg2[%c0_4, %c0_5, %c0_6], %9 {strides = array<i32>} : memref<1x30x4xf32, #tpu.memory_space<vmem>>, vector<1x1x4xf32>,
    %10 = vector.shape_cast %1 : vector<16x16x4xf32> to vector<2x8x16x4xf32>
    %cst_7 = arith.constant dense<0xFF800000> : vector<2x16x4xf32>
    %11 = vector.multi_reduction <maximumf>, %10, %cst_7 [1] : vector<2x8x16x4xf32> to vector<2x16x4xf32>
    %12 = vector.shape_cast %11 : vector<2x16x4xf32> to vector<2x2x8x4xf32>
    %cst_8 = arith.constant dense<0xFF800000> : vector<2x2x4xf32>
    %13 = vector.multi_reduction <maximumf>, %12, %cst_8 [2] : vector<2x2x8x4xf32> to vector<2x2x4xf32>
    %14 = vector.shape_cast %13 : vector<2x2x4xf32> to vector<4x4xf32>
    %c0_9 = arith.constant 0 : index
    %c1 = arith.constant 1 : index
    %c0_10 = arith.constant 0 : index
    %15 = vector.load %arg2[%c0_9, %c1, %c0_10] : memref<1x30x4xf32, #tpu.memory_space<vmem>>, vector<1x4x4xf32>
    %16 = vector.shape_cast %15 : vector<1x4x4xf32> to vector<4x4xf32>
    %17 = vector.shape_cast %14 : vector<4x4xf32> to vector<1x4x4xf32>
    tpu.vector_store %arg2[%c0_9, %c1, %c0_10], %17 {strides = array<i32>} : memref<1x30x4xf32, #tpu.memory_space<vmem>>, vector<1x4x4xf32>,
    %18 = vector.extract_strided_slice %1 {offsets = [0, 0, 0], sizes = [6, 16, 4], strides = [1, 1, 1]} : vector<16x16x4xf32> to vector<6x16x4xf32>
    %cst_11 = arith.constant dense<0xFF800000> : vector<16x4xf32>
    %19 = vector.multi_reduction <maximumf>, %18, %cst_11 [0] : vector<6x16x4xf32> to vector<16x4xf32>
    %20 = vector.shape_cast %19 : vector<16x4xf32> to vector<1x16x4xf32>
    %21 = vector.extract_strided_slice %1 {offsets = [5, 0, 0], sizes = [6, 16, 4], strides = [1, 1, 1]} : vector<16x16x4xf32> to vector<6x16x4xf32>
    %cst_12 = arith.constant dense<0xFF800000> : vector<16x4xf32>
    %22 = vector.multi_reduction <maximumf>, %21, %cst_12 [0] : vector<6x16x4xf32> to vector<16x4xf32>
    %23 = vector.shape_cast %22 : vector<16x4xf32> to vector<1x16x4xf32>
    %24 = vector.extract_strided_slice %1 {offsets = [10, 0, 0], sizes = [6, 16, 4], strides = [1, 1, 1]} : vector<16x16x4xf32> to vector<6x16x4xf32>
    %cst_13 = arith.constant dense<0xFF800000> : vector<16x4xf32>
    %25 = vector.multi_reduction <maximumf>, %24, %cst_13 [0] : vector<6x16x4xf32> to vector<16x4xf32>
    %26 = vector.shape_cast %25 : vector<16x4xf32> to vector<1x16x4xf32>
    %27 = tpu.concatenate %20, %23, %26 in 0 : vector<1x16x4xf32>, vector<1x16x4xf32>, vector<1x16x4xf32> -> vector<3x16x4xf32>
    %28 = vector.extract_strided_slice %27 {offsets = [0, 0, 0], sizes = [3, 6, 4], strides = [1, 1, 1]} : vector<3x16x4xf32> to vector<3x6x4xf32>
    %cst_14 = arith.constant dense<0xFF800000> : vector<3x4xf32>
    %29 = vector.multi_reduction <maximumf>, %28, %cst_14 [1] : vector<3x6x4xf32> to vector<3x4xf32>
    %30 = vector.shape_cast %29 : vector<3x4xf32> to vector<3x1x4xf32>
    %31 = vector.extract_strided_slice %27 {offsets = [0, 5, 0], sizes = [3, 6, 4], strides = [1, 1, 1]} : vector<3x16x4xf32> to vector<3x6x4xf32>
    %cst_15 = arith.constant dense<0xFF800000> : vector<3x4xf32>
    %32 = vector.multi_reduction <maximumf>, %31, %cst_15 [1] : vector<3x6x4xf32> to vector<3x4xf32>
    %33 = vector.shape_cast %32 : vector<3x4xf32> to vector<3x1x4xf32>
    %34 = vector.extract_strided_slice %27 {offsets = [0, 10, 0], sizes = [3, 6, 4], strides = [1, 1, 1]} : vector<3x16x4xf32> to vector<3x6x4xf32>
    %cst_16 = arith.constant dense<0xFF800000> : vector<3x4xf32>
    %35 = vector.multi_reduction <maximumf>, %34, %cst_16 [1] : vector<3x6x4xf32> to vector<3x4xf32>
    %36 = vector.shape_cast %35 : vector<3x4xf32> to vector<3x1x4xf32>
    %37 = tpu.concatenate %30, %33, %36 in 1 : vector<3x1x4xf32>, vector<3x1x4xf32>, vector<3x1x4xf32> -> vector<3x3x4xf32>
    %38 = vector.shape_cast %37 : vector<3x3x4xf32> to vector<9x4xf32>
    %c0_17 = arith.constant 0 : index
    %c5 = arith.constant 5 : index
    %c0_18 = arith.constant 0 : index
    %39 = vector.load %arg2[%c0_17, %c5, %c0_18] : memref<1x30x4xf32, #tpu.memory_space<vmem>>, vector<1x9x4xf32>
    %40 = vector.shape_cast %39 : vector<1x9x4xf32> to vector<9x4xf32>
    %41 = vector.shape_cast %38 : vector<9x4xf32> to vector<1x9x4xf32>
    tpu.vector_store %arg2[%c0_17, %c5, %c0_18], %41 {strides = array<i32>} : memref<1x30x4xf32, #tpu.memory_space<vmem>>, vector<1x9x4xf32>,
    %42 = vector.shape_cast %1 : vector<16x16x4xf32> to vector<4x4x16x4xf32>
    %cst_19 = arith.constant dense<0xFF800000> : vector<4x16x4xf32>
    %43 = vector.multi_reduction <maximumf>, %42, %cst_19 [1] : vector<4x4x16x4xf32> to vector<4x16x4xf32>
    %44 = vector.shape_cast %43 : vector<4x16x4xf32> to vector<4x4x4x4xf32>
    %cst_20 = arith.constant dense<0xFF800000> : vector<4x4x4xf32>
    %45 = vector.multi_reduction <maximumf>, %44, %cst_20 [2] : vector<4x4x4x4xf32> to vector<4x4x4xf32>
    %46 = vector.shape_cast %45 : vector<4x4x4xf32> to vector<16x4xf32>
    %c0_21 = arith.constant 0 : index
    %c14 = arith.constant 14 : index
    %c0_22 = arith.constant 0 : index
    %47 = vector.load %arg2[%c0_21, %c14, %c0_22] : memref<1x30x4xf32, #tpu.memory_space<vmem>>, vector<1x16x4xf32>
    %48 = vector.shape_cast %47 : vector<1x16x4xf32> to vector<16x4xf32>
    %49 = vector.shape_cast %46 : vector<16x4xf32> to vector<1x16x4xf32>
    tpu.vector_store %arg2[%c0_21, %c14, %c0_22], %49 {strides = array<i32>} : memref<1x30x4xf32, #tpu.memory_space<vmem>>, vector<1x16x4xf32>,
    return
  }
  func.func @transform_0(%arg0: i32) -> (i32, i32, i32, i32) {
    %c0_i32 = arith.constant 0 : i32
    %c0_i32_0 = arith.constant 0 : i32
    %c0_i32_1 = arith.constant 0 : i32
    %c0_i32_2 = arith.constant 0 : i32
    return %arg0, %c0_i32, %c0_i32_0, %c0_i32_1 : i32, i32, i32, i32
  }
  func.func @transform_1(%arg0: i32) -> (i32, i32, i32) {
    %c0_i32 = arith.constant 0 : i32
    %c0_i32_0 = arith.constant 0 : i32
    %c0_i32_1 = arith.constant 0 : i32
    return %arg0, %c0_i32, %c0_i32_0 : i32, i32, i32
  }
}

</mosaic_0001>

<llo_original>
// kernel: tpu_custom_call.1
$region0: #{tpu_custom_call.1}
  #allocation0 [shape = 'u32[]', space=smem, size = 0x4, offset = 0x4, fixed_abs, tag = 'smem constant byte address 0x4 - core index']
  #allocation1 [shape = 'u32[72,128]{1,0:T(1,128)}', space=vmem, size = 0x9000, scoped, tag = 'internal scratch']
  %s0 = inlined_call_operand.vmem [shape: f32[2,16,16,4], index: 0, kind: input, shape index: {}]
  %s1 = inlined_call_operand.vmem [shape: f32[2,30,4], index: 1, kind: output, shape index: {}]
  %s2 = sld [smem:[#allocation0]]
  $region37: #{tpu_custom_call.1} parent=0
    _
  %s4 = ssub.s32 1, %s2
  %s5 = scalar_select 0, %s4, %s2
  loop: start=0, step=1, limit=4
  $region2: #{tpu_custom_call.1} parent=0 // loop_pre_header
    _
  $region3: #{tpu_custom_call.1} parent=0 // loop_header
    %s7 = sphi 0, %s11
    %p8 = scmp.ge.s32.totalorder %s7, 4
    %s17 = sphi 0, %s19
    %s20 = sphi 0, %s17
    %s21 = sphi 0, %s20
    %s37 = sphi 0, %s21
    %s43 = sphi 0, %s45
    %s46 = sphi 0, %s43
    %s47 = sphi 0, %s46
    %s63 = sphi 0, %s47
  $region4: #{tpu_custom_call.1} parent=0 // loop_header_branch
    %10 = sbr.rel (%p8) target = $region8
  $region5: #{tpu_custom_call.1} parent=0 // loop_body
    %s12 = ssub.s32 %s7, 1
    %s13 = ssub.s32 %s7, 2
    %s14 = sadd.s32 %s7, 1
    %s15 = ssub.s32 %s7, %s14
    %p16 = scmp.eq.s32.totalorder %s15, 0
    %s18 = sadd.s32 %s17, 1
    %s19 = scalar_select %p16, %s17, %s18
    %p22 = pneg %p16
    %p23 = scmp.eq.s32.totalorder %s7, 1
    %p24 = por %p22, %p23
    %p25 = scmp.ne.s32.totalorder %s17, %s20
    %p26 = scmp.eq.s32.totalorder %s7, 0
    %p27 = por %p25, %p26
    %p28 = scmp.ne.s32.totalorder %s17, %s20
    %p29 = scmp.eq.s32.totalorder %s12, 1
    %p30 = por %p28, %p29
    %p31 = scmp.ne.s32.totalorder %s20, %s21
    %p32 = scmp.eq.s32.totalorder %s12, 0
    %p33 = por %p31, %p32
    %p34 = scmp.ne.s32.totalorder %s20, %s21
    %p35 = scmp.eq.s32.totalorder %s13, 1
    %p36 = por %p34, %p35
    %p38 = scmp.ne.s32.totalorder %s21, %s37
    %p39 = scmp.eq.s32.totalorder %s13, 0
    %p40 = por %p38, %p39
    %s41 = ssub.s32 %s7, %s14
    %p42 = scmp.eq.s32.totalorder %s41, 0
    %s44 = sadd.s32 %s43, 1
    %s45 = scalar_select %p42, %s43, %s44
    %p48 = pneg %p42
    %p49 = scmp.eq.s32.totalorder %s7, 1
    %p50 = por %p48, %p49
    %p51 = scmp.ne.s32.totalorder %s43, %s46
    %p52 = scmp.eq.s32.totalorder %s7, 0
    %p53 = por %p51, %p52
    %p54 = scmp.ne.s32.totalorder %s43, %s46
    %p55 = scmp.eq.s32.totalorder %s12, 1
    %p56 = por %p54, %p55
    %p57 = scmp.ne.s32.totalorder %s46, %s47
    %p58 = scmp.eq.s32.totalorder %s12, 0
    %p59 = por %p57, %p58
    %p60 = scmp.ne.s32.totalorder %s46, %s47
    %p61 = scmp.eq.s32.totalorder %s13, 1
    %p62 = por %p60, %p61
    %p64 = scmp.ne.s32.totalorder %s47, %s63
    %p65 = scmp.eq.s32.totalorder %s13, 0
    %p66 = por %p64, %p65
    %p67 = scmp.le.s32.totalorder 1, %s7
    %p68 = scmp.lt.s32.totalorder %s7, 3
    %p69 = pnand %p67, %p68
    %p70 = pneg %p69
    // Predicated region
    $region9: #{tpu_custom_call.1} parent=5 // pred_check
      _
    $region10: #{tpu_custom_call.1} parent=5 // pred_check_branch
      %72 = sbr.rel (%p69) target = $region12
    $region11: #{tpu_custom_call.1} parent=5 // pred_region
      %s73 = ssub.s32 %s7, 1
    $region12: #{tpu_custom_call.1} parent=5 // pred_fallthru
      _
    %p74 = scmp.lt.s32.totalorder %s7, 2
    // Predicated region
    $region13: #{tpu_custom_call.1} parent=5 // pred_check
      %p75 = pneg %p74
    $region14: #{tpu_custom_call.1} parent=5 // pred_check_branch
      %77 = sbr.rel (%p75) target = $region16
    $region15: #{tpu_custom_call.1} parent=5 // pred_region
      // Predicated region
      $region17: #{tpu_custom_call.1} parent=15 // pred_check
        %p78 = pneg %p27
      $region18: #{tpu_custom_call.1} parent=15 // pred_check_branch
        %80 = sbr.rel (%p78) target = $region20
      $region19: #{tpu_custom_call.1} parent=15 // pred_region
        %p81 = scmp.lt.s32.totalorder %s7, 1
        %s82 = scalar_select %p81, %s7, 1
        %s83 = smul.addr %s82, 32
        %s84 = smul.addr %s83, 8
        %s85 = scalar_lea.vmem %s0, %s84
      $region20: #{tpu_custom_call.1} parent=15 // pred_fallthru
        _
    $region16: #{tpu_custom_call.1} parent=5 // pred_fallthru
      _
    %p86 = scmp.le.s32.totalorder 1, %s7
    %p87 = scmp.lt.s32.totalorder %s7, 3
    %p88 = pnand %p86, %p87
    %p89 = pneg %p88
    // Predicated region
    $region21: #{tpu_custom_call.1} parent=5 // pred_check
      _
    $region22: #{tpu_custom_call.1} parent=5 // pred_check_branch
      %91 = sbr.rel (%p88) target = $region24
    $region23: #{tpu_custom_call.1} parent=5 // pred_region
      %s92 = ssub.s32 %s7, 1
      %p93 = scmp.lt.s32.totalorder %s12, 1
      %s94 = scalar_select %p93, %s12, 1
      %s95 = smul.addr %s94, 32
      %s96 = smul.addr %s95, 8
      %s97 = scalar_lea.vmem %s0, %s96
      %p98 = pneg %p33
      %p99 = pneg %p30
      %p100 = pneg %p59
      %p101 = pneg %p56
      %p102 = scmp.lt.s32.totalorder %s12, 1
      %s103 = scalar_select %p102, %s12, 1
      %s104 = smul.addr %s103, 4
      %s105 = smul.addr %s104, 8
      %s106 = scalar_lea.vmem %s1, %s105
      %p107 = scmp.lt.s32.totalorder %s12, 1
      %s108 = scalar_select %p107, %s12, 1
      %s109 = smul.addr %s108, 32
      %s110 = smul.addr %s109, 8
      %s111 = scalar_lea.vmem %s0, %s110
      %p112 = scmp.lt.s32.totalorder %s12, 1
      %s113 = scalar_select %p112, %s12, 1
      %s114 = smul.addr %s113, 4
      %s115 = smul.addr %s114, 8
      %s116 = scalar_lea.vmem %s1, %s115
      %v117 = vld [vmem:[%s111] sm:$0xff]
      %v118 = vld [vmem:[%s111 + $0x8] sm:$0xff]
      %v119 = vld [vmem:[%s111 + $0x10] sm:$0xff]
      %v120 = vld [vmem:[%s111 + $0x18] sm:$0xff]
      %v121 = vld [vmem:[%s111 + $0x20] sm:$0xff]
      %v122 = vld [vmem:[%s111 + $0x28] sm:$0xff]
      %v123 = vld [vmem:[%s111 + $0x30] sm:$0xff]
      %v124 = vld [vmem:[%s111 + $0x38] sm:$0xff]
      %v125 = vld [vmem:[%s111 + $0x40] sm:$0xff]
      %v126 = vld [vmem:[%s111 + $0x48] sm:$0xff]
      %v127 = vld [vmem:[%s111 + $0x50] sm:$0xff]
      %v128 = vld [vmem:[%s111 + $0x58] sm:$0xff]
      %v129 = vld [vmem:[%s111 + $0x60] sm:$0xff]
      %v130 = vld [vmem:[%s111 + $0x68] sm:$0xff]
      %v131 = vld [vmem:[%s111 + $0x70] sm:$0xff]
      %v132 = vld [vmem:[%s111 + $0x78] sm:$0xff]
      %v133 = vld [vmem:[%s111 + $0x80] sm:$0xff]
      %v134 = vld [vmem:[%s111 + $0x88] sm:$0xff]
      %v135 = vld [vmem:[%s111 + $0x90] sm:$0xff]
      %v136 = vld [vmem:[%s111 + $0x98] sm:$0xff]
      %v137 = vld [vmem:[%s111 + $0xa0] sm:$0xff]
      %v138 = vld [vmem:[%s111 + $0xa8] sm:$0xff]
      %v139 = vld [vmem:[%s111 + $0xb0] sm:$0xff]
      %v140 = vld [vmem:[%s111 + $0xb8] sm:$0xff]
      %v141 = vld [vmem:[%s111 + $0xc0] sm:$0xff]
      %v142 = vld [vmem:[%s111 + $0xc8] sm:$0xff]
      %v143 = vld [vmem:[%s111 + $0xd0] sm:$0xff]
      %v144 = vld [vmem:[%s111 + $0xd8] sm:$0xff]
      %v145 = vld [vmem:[%s111 + $0xe0] sm:$0xff]
      %v146 = vld [vmem:[%s111 + $0xe8] sm:$0xff]
      %v147 = vld [vmem:[%s111 + $0xf0] sm:$0xff]
      %v148 = vld [vmem:[%s111 + $0xf8] sm:$0xff]
      %vm149 = vcmask 31744
      %v150 = vsel %vm149, %v117, -inf
      %v151 = vsel %vm149, %v119, -inf
      %v152 = vsel %vm149, %v121, -inf
      %v153 = vmax.f32 %v150, %v152
      %v154 = vsel %vm149, %v123, -inf
      %v155 = vmax.f32 %v151, %v154
      %v156 = vsel %vm149, %v125, -inf
      %v157 = vmax.f32 %v153, %v156
      %v158 = vsel %vm149, %v127, -inf
      %v159 = vmax.f32 %v155, %v158
      %v160 = vsel %vm149, %v129, -inf
      %v161 = vmax.f32 %v157, %v160
      %v162 = vsel %vm149, %v131, -inf
      %v163 = vmax.f32 %v159, %v162
      %v164 = vsel %vm149, %v133, -inf
      %v165 = vmax.f32 %v161, %v164
      %v166 = vsel %vm149, %v135, -inf
      %v167 = vmax.f32 %v163, %v166
      %v168 = vsel %vm149, %v137, -inf
      %v169 = vmax.f32 %v165, %v168
      %v170 = vsel %vm149, %v139, -inf
      %v171 = vmax.f32 %v167, %v170
      %v172 = vsel %vm149, %v141, -inf
      %v173 = vmax.f32 %v169, %v172
      %v174 = vsel %vm149, %v143, -inf
      %v175 = vmax.f32 %v171, %v174
      %v176 = vsel %vm149, %v145, -inf
      %v177 = vmax.f32 %v173, %v176
      %v178 = vsel %vm149, %v147, -inf
      %v179 = vmax.f32 %v175, %v178
      %v180 = vmax.f32 %v177, %v179
      %v181 = vsel %vm149, %v118, -inf
      %v182 = vsel %vm149, %v120, -inf
      %v183 = vsel %vm149, %v122, -inf
      %v184 = vmax.f32 %v181, %v183
      %v185 = vsel %vm149, %v124, -inf
      %v186 = vmax.f32 %v182, %v185
      %v187 = vsel %vm149, %v126, -inf
      %v188 = vmax.f32 %v184, %v187
      %v189 = vsel %vm149, %v128, -inf
      %v190 = vmax.f32 %v186, %v189
      %v191 = vsel %vm149, %v130, -inf
      %v192 = vmax.f32 %v188, %v191
      %v193 = vsel %vm149, %v132, -inf
      %v194 = vmax.f32 %v190, %v193
      %v195 = vsel %vm149, %v134, -inf
      %v196 = vmax.f32 %v192, %v195
      %v197 = vsel %vm149, %v136, -inf
      %v198 = vmax.f32 %v194, %v197
      %v199 = vsel %vm149, %v138, -inf
      %v200 = vmax.f32 %v196, %v199
      %v201 = vsel %vm149, %v140, -inf
      %v202 = vmax.f32 %v198, %v201
      %v203 = vsel %vm149, %v142, -inf
      %v204 = vmax.f32 %v200, %v203
      %v205 = vsel %vm149, %v144, -inf
      %v206 = vmax.f32 %v202, %v205
      %v207 = vsel %vm149, %v146, -inf
      %v208 = vmax.f32 %v204, %v207
      %v209 = vsel %vm149, %v148, -inf
      %v210 = vmax.f32 %v206, %v209
      %v211 = vmax.f32 %v208, %v210
      %v212 = vsel %vm149, %v180, -inf
      %v213 = vsel %vm149, %v211, -inf
      %v214 = vmax.f32 %v212, %v213
      %v215 = vrot.slane %v214, 4
      %v216 = vmax.f32 %v214, %v215
      %v217 = vrot.slane %v216, 2
      %v218 = vmax.f32 %v216, %v217
      %v219 = vrot.slane %v218, 1
      %v220 = vmax.f32 %v218, %v219
      %vm221 = vcmask 24576
      %222 = vst.msk [vmem:[%s116] sm:$0x1] %vm221, %v220
      %v223 = vmax.f32 %v150, %v151
      %v224 = vmax.f32 %v223, %v152
      %v225 = vmax.f32 %v224, %v154
      %v226 = vmax.f32 %v225, %v156
      %v227 = vmax.f32 %v226, %v158
      %v228 = vmax.f32 %v227, %v160
      %v229 = vmax.f32 %v228, %v162
      %v230 = vmax.f32 %v181, %v182
      %v231 = vmax.f32 %v230, %v183
      %v232 = vmax.f32 %v231, %v185
      %v233 = vmax.f32 %v232, %v187
      %v234 = vmax.f32 %v233, %v189
      %v235 = vmax.f32 %v234, %v191
      %v236 = vmax.f32 %v235, %v193
      %v237 = vmax.f32 %v164, %v166
      %v238 = vmax.f32 %v237, %v168
      %v239 = vmax.f32 %v238, %v170
      %v240 = vmax.f32 %v239, %v172
      %v241 = vmax.f32 %v240, %v174
      %v242 = vmax.f32 %v241, %v176
      %v243 = vmax.f32 %v242, %v178
      %v244 = vmax.f32 %v195, %v197
      %v245 = vmax.f32 %v244, %v199
      %v246 = vmax.f32 %v245, %v201
      %v247 = vmax.f32 %v246, %v203
      %v248 = vmax.f32 %v247, %v205
      %v249 = vmax.f32 %v248, %v207
      %v250 = vmax.f32 %v249, %v209
      %v251 = vsel %vm149, %v229, -inf
      %v252 = vrot.slane %v251, 4
      %v253 = vmax.f32 %v251, %v252
      %v254 = vrot.slane %v253, 2
      %v255 = vmax.f32 %v253, %v254
      %v256 = vrot.slane %v255, 1
      %v257 = vmax.f32 %v255, %v256
      %v258 = vsel %vm149, %v236, -inf
      %v259 = vrot.slane %v258, 4
      %v260 = vmax.f32 %v258, %v259
      %v261 = vrot.slane %v260, 2
      %v262 = vmax.f32 %v260, %v261
      %v263 = vrot.slane %v262, 1
      %v264 = vmax.f32 %v262, %v263
      %v265 = vsel %vm149, %v243, -inf
      %v266 = vrot.slane %v265, 4
      %v267 = vmax.f32 %v265, %v266
      %v268 = vrot.slane %v267, 2
      %v269 = vmax.f32 %v267, %v268
      %v270 = vrot.slane %v269, 1
      %v271 = vmax.f32 %v269, %v270
      %v272 = vsel %vm149, %v250, -inf
      %v273 = vrot.slane %v272, 4
      %v274 = vmax.f32 %v272, %v273
      %v275 = vrot.slane %v274, 2
      %v276 = vmax.f32 %v274, %v275
      %v277 = vrot.slane %v276, 1
      %v278 = vmax.f32 %v276, %v277
      %vm283 = vcmask 1041409
      %v284 = vsel %vm283, %v264, %v257
      %vm285 = vcmask 1042434
      %v286 = vsel %vm285, %v271, %v284
      %vm287 = vcmask 1043459
      %v288 = vsel %vm287, %v278, %v286
      %vm290 = vcmask 27648
      %291 = vst.msk [vmem:[%s116 + $0x1] sm:$0xf] %vm290, %v288
      %v292 = vmax.f32 %v157, %v159
      %v293 = vmax.f32 %v188, %v190
      %v294 = vmax.f32 %v158, %v162
      %v295 = vmax.f32 %v160, %v164
      %v296 = vmax.f32 %v294, %v166
      %v297 = vmax.f32 %v295, %v168
      %v298 = vmax.f32 %v296, %v297
      %v299 = vmax.f32 %v189, %v193
      %v300 = vmax.f32 %v191, %v195
      %v301 = vmax.f32 %v299, %v197
      %v302 = vmax.f32 %v300, %v199
      %v303 = vmax.f32 %v301, %v302
      %v304 = vmax.f32 %v168, %v172
      %v305 = vmax.f32 %v170, %v174
      %v306 = vmax.f32 %v304, %v176
      %v307 = vmax.f32 %v305, %v178
      %v308 = vmax.f32 %v306, %v307
      %v309 = vmax.f32 %v199, %v203
      %v310 = vmax.f32 %v201, %v205
      %v311 = vmax.f32 %v309, %v207
      %v312 = vmax.f32 %v310, %v209
      %v313 = vmax.f32 %v311, %v312
      %vm314 = vcmask 29696
      %v315 = vsel %vm314, %v292, -inf
      %v316 = vrot.slane %v315, 4
      %v317 = vmax.f32 %v315, %v316
      %v318 = vrot.slane %v317, 2
      %v319 = vmax.f32 %v317, %v318
      %v320 = vrot.slane %v319, 1
      %v321 = vmax.f32 %v319, %v320
      %v322 = vsel %vm314, %v298, -inf
      %v323 = vrot.slane %v322, 4
      %v324 = vmax.f32 %v322, %v323
      %v325 = vrot.slane %v324, 2
      %v326 = vmax.f32 %v324, %v325
      %v327 = vrot.slane %v326, 1
      %v328 = vmax.f32 %v326, %v327
      %v329 = vsel %vm314, %v308, -inf
      %v330 = vrot.slane %v329, 4
      %v331 = vmax.f32 %v329, %v330
      %v332 = vrot.slane %v331, 2
      %v333 = vmax.f32 %v331, %v332
      %v334 = vrot.slane %v333, 1
      %v335 = vmax.f32 %v333, %v334
      %vm336 = vcmask 31749
      %v337 = vsel %vm336, %v292, -inf
      %vm338 = vcmask 26624
      %v339 = vsel %vm338, %v293, -inf
      %v340 = vmax.f32 %v337, %v339
      %v341 = vrot.slane %v340, 4
      %v342 = vmax.f32 %v340, %v341
      %v343 = vrot.slane %v342, 2
      %v344 = vmax.f32 %v342, %v343
      %v345 = vrot.slane %v344, 1
      %v346 = vmax.f32 %v344, %v345
      %v347 = vsel %vm336, %v298, -inf
      %v348 = vsel %vm338, %v303, -inf
      %v349 = vmax.f32 %v347, %v348
      %v350 = vrot.slane %v349, 4
      %v351 = vmax.f32 %v349, %v350
      %v352 = vrot.slane %v351, 2
      %v353 = vmax.f32 %v351, %v352
      %v354 = vrot.slane %v353, 1
      %v355 = vmax.f32 %v353, %v354
      %v356 = vsel %vm336, %v308, -inf
      %v357 = vsel %vm338, %v313, -inf
      %v358 = vmax.f32 %v356, %v357
      %v359 = vrot.slane %v358, 4
      %v360 = vmax.f32 %v358, %v359
      %v361 = vrot.slane %v360, 2
      %v362 = vmax.f32 %v360, %v361
      %v363 = vrot.slane %v362, 1
      %v364 = vmax.f32 %v362, %v363
      %vm365 = vcmask 31746
      %v366 = vsel %vm365, %v293, -inf
      %v367 = vrot.slane %v366, 4
      %v368 = vmax.f32 %v366, %v367
      %v369 = vrot.slane %v368, 2
      %v370 = vmax.f32 %v368, %v369
      %v371 = vrot.slane %v370, 1
      %v372 = vmax.f32 %v370, %v371
      %v373 = vsel %vm365, %v303, -inf
      %v374 = vrot.slane %v373, 4
      %v375 = vmax.f32 %v373, %v374
      %v376 = vrot.slane %v375, 2
      %v377 = vmax.f32 %v375, %v376
      %v378 = vrot.slane %v377, 1
      %v379 = vmax.f32 %v377, %v378
      %v380 = vsel %vm365, %v313, -inf
      %v381 = vrot.slane %v380, 4
      %v382 = vmax.f32 %v380, %v381
      %v383 = vrot.slane %v382, 2
      %v384 = vmax.f32 %v382, %v383
      %v385 = vrot.slane %v384, 1
      %v386 = vmax.f32 %v384, %v385
      %vm387 = vcmask 1040384
      %v388 = vsel %vm387, %v321, %v346
      %v389 = vsel %vm387, %v328, %v355
      %v390 = vsel %vm387, %v335, %v364
      %vm391 = vcmask 1041408
      %v392 = vsel %vm391, %v388, %v372
      %v393 = vsel %vm391, %v389, %v379
      %v394 = vsel %vm391, %v390, %v386
      %v398 = vrot.slane %v392, 1
      %v399 = vrot.slane %v392, 2
      %v400 = vrot.slane %v393, 1
      %v401 = vrot.slane %v393, 2
      %v402 = vrot.slane %v394, 1
      %v403 = vrot.slane %v394, 2
      %404 = vst [vmem:[#allocation1] ss:$9 sm:$0xff] %v392
      %s405 = scalar_lea.vmem [#allocation1], 1
      %406 = vst [vmem:[%s405] ss:$9 sm:$0xff] %v398
      %s407 = scalar_lea.vmem [#allocation1], 2
      %408 = vst [vmem:[%s407] ss:$9 sm:$0xff] %v399
      %s409 = scalar_lea.vmem [#allocation1], 3
      %410 = vst [vmem:[%s409] ss:$9 sm:$0xff] %v393
      %s411 = scalar_lea.vmem [#allocation1], 4
      %412 = vst [vmem:[%s411] ss:$9 sm:$0xff] %v400
      %s413 = scalar_lea.vmem [#allocation1], 5
      %414 = vst [vmem:[%s413] ss:$9 sm:$0xff] %v401
      %s415 = scalar_lea.vmem [#allocation1], 6
      %416 = vst [vmem:[%s415] ss:$9 sm:$0xff] %v394
      %s417 = scalar_lea.vmem [#allocation1], 7
      %418 = vst [vmem:[%s417] ss:$9 sm:$0xff] %v402
      %v419 = vld [vmem:[#allocation1] sm:$0xff]
      %420 = vst [vmem:[#allocation1] ss:$9 sm:$0xff] %v403
      %v421 = vld [vmem:[#allocation1] sm:$0xff]
      %424 = vst.msk [vmem:[%s116 + $0x5] sm:$0xff] %vm149, %v419
      %425 = vst.msk [vmem:[%s116 + $0xd] sm:$0x1] %vm221, %v421
      %v426 = vmax.f32 %v156, %v158
      %v427 = vmax.f32 %v426, %v160
      %v428 = vmax.f32 %v427, %v162
      %v429 = vmax.f32 %v187, %v189
      %v430 = vmax.f32 %v429, %v191
      %v431 = vmax.f32 %v430, %v193
      %v432 = vmax.f32 %v172, %v174
      %v433 = vmax.f32 %v432, %v176
      %v434 = vmax.f32 %v433, %v178
      %v435 = vmax.f32 %v203, %v205
      %v436 = vmax.f32 %v435, %v207
      %v437 = vmax.f32 %v436, %v209
      %v446 = vrot.slane %v225, 4
      %v447 = vrot.slane %v232, 4
      %v448 = vrot.slane %v428, 4
      %v449 = vrot.slane %v431, 4
      %v450 = vrot.slane %v239, 4
      %v451 = vrot.slane %v246, 4
      %v452 = vrot.slane %v434, 4
      %v453 = vrot.slane %v437, 4
      %v462 = vsel %vm290, %v225, -inf
      %v463 = vrot.slane %v462, 4
      %v464 = vmax.f32 %v462, %v463
      %v465 = vrot.slane %v464, 2
      %v466 = vmax.f32 %v464, %v465
      %v467 = vrot.slane %v466, 1
      %v468 = vmax.f32 %v466, %v467
      %v469 = vsel %vm290, %v446, -inf
      %v470 = vrot.slane %v469, 4
      %v471 = vmax.f32 %v469, %v470
      %v472 = vrot.slane %v471, 2
      %v473 = vmax.f32 %v471, %v472
      %v474 = vrot.slane %v473, 1
      %v475 = vmax.f32 %v473, %v474
      %v476 = vsel %vm290, %v232, -inf
      %v477 = vrot.slane %v476, 4
      %v478 = vmax.f32 %v476, %v477
      %v479 = vrot.slane %v478, 2
      %v480 = vmax.f32 %v478, %v479
      %v481 = vrot.slane %v480, 1
      %v482 = vmax.f32 %v480, %v481
      %v483 = vsel %vm290, %v447, -inf
      %v484 = vrot.slane %v483, 4
      %v485 = vmax.f32 %v483, %v484
      %v486 = vrot.slane %v485, 2
      %v487 = vmax.f32 %v485, %v486
      %v488 = vrot.slane %v487, 1
      %v489 = vmax.f32 %v487, %v488
      %v490 = vsel %vm290, %v428, -inf
      %v491 = vrot.slane %v490, 4
      %v492 = vmax.f32 %v490, %v491
      %v493 = vrot.slane %v492, 2
      %v494 = vmax.f32 %v492, %v493
      %v495 = vrot.slane %v494, 1
      %v496 = vmax.f32 %v494, %v495
      %v497 = vsel %vm290, %v448, -inf
      %v498 = vrot.slane %v497, 4
      %v499 = vmax.f32 %v497, %v498
      %v500 = vrot.slane %v499, 2
      %v501 = vmax.f32 %v499, %v500
      %v502 = vrot.slane %v501, 1
      %v503 = vmax.f32 %v501, %v502
      %v504 = vsel %vm290, %v431, -inf
      %v505 = vrot.slane %v504, 4
      %v506 = vmax.f32 %v504, %v505
      %v507 = vrot.slane %v506, 2
      %v508 = vmax.f32 %v506, %v507
      %v509 = vrot.slane %v508, 1
      %v510 = vmax.f32 %v508, %v509
      %v511 = vsel %vm290, %v449, -inf
      %v512 = vrot.slane %v511, 4
      %v513 = vmax.f32 %v511, %v512
      %v514 = vrot.slane %v513, 2
      %v515 = vmax.f32 %v513, %v514
      %v516 = vrot.slane %v515, 1
      %v517 = vmax.f32 %v515, %v516
      %v518 = vsel %vm290, %v239, -inf
      %v519 = vrot.slane %v518, 4
      %v520 = vmax.f32 %v518, %v519
      %v521 = vrot.slane %v520, 2
      %v522 = vmax.f32 %v520, %v521
      %v523 = vrot.slane %v522, 1
      %v524 = vmax.f32 %v522, %v523
      %v525 = vsel %vm290, %v450, -inf
      %v526 = vrot.slane %v525, 4
      %v527 = vmax.f32 %v525, %v526
      %v528 = vrot.slane %v527, 2
      %v529 = vmax.f32 %v527, %v528
      %v530 = vrot.slane %v529, 1
      %v531 = vmax.f32 %v529, %v530
      %v532 = vsel %vm290, %v246, -inf
      %v533 = vrot.slane %v532, 4
      %v534 = vmax.f32 %v532, %v533
      %v535 = vrot.slane %v534, 2
      %v536 = vmax.f32 %v534, %v535
      %v537 = vrot.slane %v536, 1
      %v538 = vmax.f32 %v536, %v537
      %v539 = vsel %vm290, %v451, -inf
      %v540 = vrot.slane %v539, 4
      %v541 = vmax.f32 %v539, %v540
      %v542 = vrot.slane %v541, 2
      %v543 = vmax.f32 %v541, %v542
      %v544 = vrot.slane %v543, 1
      %v545 = vmax.f32 %v543, %v544
      %v546 = vsel %vm290, %v434, -inf
      %v547 = vrot.slane %v546, 4
      %v548 = vmax.f32 %v546, %v547
      %v549 = vrot.slane %v548, 2
      %v550 = vmax.f32 %v548, %v549
      %v551 = vrot.slane %v550, 1
      %v552 = vmax.f32 %v550, %v551
      %v553 = vsel %vm290, %v452, -inf
      %v554 = vrot.slane %v553, 4
      %v555 = vmax.f32 %v553, %v554
      %v556 = vrot.slane %v555, 2
      %v557 = vmax.f32 %v555, %v556
      %v558 = vrot.slane %v557, 1
      %v559 = vmax.f32 %v557, %v558
      %v560 = vsel %vm290, %v437, -inf
      %v561 = vrot.slane %v560, 4
      %v562 = vmax.f32 %v560, %v561
      %v563 = vrot.slane %v562, 2
      %v564 = vmax.f32 %v562, %v563
      %v565 = vrot.slane %v564, 1
      %v566 = vmax.f32 %v564, %v565
      %v567 = vsel %vm290, %v453, -inf
      %v568 = vrot.slane %v567, 4
      %v569 = vmax.f32 %v567, %v568
      %v570 = vrot.slane %v569, 2
      %v571 = vmax.f32 %v569, %v570
      %v572 = vrot.slane %v571, 1
      %v573 = vmax.f32 %v571, %v572
      %v590 = vsel %vm283, %v475, %v468
      %v591 = vsel %vm285, %v482, %v590
      %v592 = vsel %vm287, %v489, %v591
      %vm593 = vcmask 1044484
      %v594 = vsel %vm593, %v496, %v592
      %vm595 = vcmask 1045509
      %v596 = vsel %vm595, %v503, %v594
      %vm597 = vcmask 1046534
      %v598 = vsel %vm597, %v510, %v596
      %vm599 = vcmask 1047559
      %v600 = vsel %vm599, %v517, %v598
      %v601 = vsel %vm283, %v531, %v524
      %v602 = vsel %vm285, %v538, %v601
      %v603 = vsel %vm287, %v545, %v602
      %v604 = vsel %vm593, %v552, %v603
      %v605 = vsel %vm595, %v559, %v604
      %v606 = vsel %vm597, %v566, %v605
      %v607 = vsel %vm599, %v573, %v606
      %610 = vst.msk [vmem:[%s116 + $0xe] sm:$0xff] %vm149, %v600
      %611 = vst.msk [vmem:[%s116 + $0x16] sm:$0xff] %vm149, %v607
      %p612 = scmp.lt.s32.totalorder %s12, 1
      %s613 = scalar_select %p612, %s12, 1
      %s614 = smul.addr %s613, 4
      %s615 = smul.addr %s614, 8
      %s616 = scalar_lea.vmem %s1, %s615
      // Predicated region
      $region25: #{tpu_custom_call.1} parent=23 // pred_check
        %p617 = pneg %p56
      $region26: #{tpu_custom_call.1} parent=23 // pred_check_branch
        %619 = sbr.rel (%p617) target = $region28
      $region27: #{tpu_custom_call.1} parent=23 // pred_region
        _
      $region28: #{tpu_custom_call.1} parent=23 // pred_fallthru
        _
    $region24: #{tpu_custom_call.1} parent=5 // pred_fallthru
      _
    %p620 = scmp.le.s32.totalorder 2, %s7
    // Predicated region
    $region29: #{tpu_custom_call.1} parent=5 // pred_check
      %p621 = pneg %p620
    $region30: #{tpu_custom_call.1} parent=5 // pred_check_branch
      %623 = sbr.rel (%p621) target = $region32
    $region31: #{tpu_custom_call.1} parent=5 // pred_region
      %s624 = ssub.s32 %s7, 2
      // Predicated region
      $region33: #{tpu_custom_call.1} parent=31 // pred_check
        %p625 = pneg %p62
      $region34: #{tpu_custom_call.1} parent=31 // pred_check_branch
        %627 = sbr.rel (%p625) target = $region36
      $region35: #{tpu_custom_call.1} parent=31 // pred_region
        %p628 = scmp.lt.s32.totalorder %s13, 1
        %s629 = scalar_select %p628, %s13, 1
        %s630 = smul.addr %s629, 4
        %s631 = smul.addr %s630, 8
        %s632 = scalar_lea.vmem %s1, %s631
      $region36: #{tpu_custom_call.1} parent=31 // pred_fallthru
        _
    $region32: #{tpu_custom_call.1} parent=5 // pred_fallthru
      _
  $region6: #{tpu_custom_call.1} parent=0 // loop_footer
    %s11 = sadd.s32 1, %s7
  $region7: #{tpu_custom_call.1} parent=0 // loop_footer_branch
    %6 = sbr.rel target = $region3
  $region8: #{tpu_custom_call.1} parent=0 // loop_exit
    _

</llo_original>
